<compile_context>
chip_gen: v5e
topology: v5e:2x2
jax: 0.10.0
libtpu: 0.0.40
codegen_flags: <defaults>
</compile_context>

<pallas_src>
import numpy as np

import jax
import jax.numpy as jnp
from jax.experimental import pallas as pl
from jax.experimental.pallas import tpu as pltpu

LANES = 128              # lane width (last dim of every vreg)
SUBLANES = 8             # f32 sublane width
NUM_SPLITS = 2           # leading "parallel" axis (2 TCs on v7x; harmless elsewhere)
VMEM_LIMIT_BYTES = 48 * 1024 * 1024


def _cdiv(a, b):
    return -(-a // b)


def _round_up(x, m):
    return _cdiv(x, m) * m


def _min_sublane_tile(dtype):
    """Minimum legal sublane tile for a dtype: 8 (>=32b), 16 (16b), 32 (8b/bool)."""
    itemsize = jnp.dtype(dtype).itemsize
    if itemsize >= 4:
        return 8
    if itemsize == 2:
        return 16
    return 32


def _default_max_tm():
    """Per-generation max rows per grid step (bounded by scoped VMEM / step overhead)."""
    try:
        kind = jax.devices()[0].device_kind.lower()
    except Exception:
        return 2048
    if "v7" in kind:
        return 4096
    if "v5 lite" in kind or "v5e" in kind or "v5lite" in kind:
        return 1024
    return 2048


def _make_kernel(tm, steps, rows, ragged):
    """Kernel over (tm, 128) tiles; accumulates into per-split (1, 8, 128) outputs."""

    def kernel(pred_ref, label_ref, mask_ref, loss_ref, msum_ref):
        i = pl.program_id(1)  # reduction axis (last)

        # Zero this split's resident output accumulators on its first step.
        @pl.when(i == 0)
        def _():
            loss_ref[...] = jnp.zeros_like(loss_ref)
            msum_ref[...] = jnp.zeros_like(msum_ref)

        p = pred_ref[...].astype(jnp.float32)
        y = label_ref[...].astype(jnp.float32)
        m = mask_ref[...].astype(jnp.float32)

        if ragged:
            # Row-validity mask for the partial last block and for fully
            # out-of-range (clamped) blocks: garbage rows contribute nothing
            # and are sanitized so logs stay finite (no NaN leakage).
            blk = pl.program_id(0) * steps + i
            row_ids = blk * tm + jax.lax.broadcasted_iota(jnp.int32, (tm, LANES), 0)
            valid = row_ids < rows
            m = jnp.where(valid, m, 0.0)
            y = jnp.where(valid, y, 0.0)
            p = jnp.where(valid, p, 0.5)

        # PyTorch's binary_cross_entropy clamps the log terms at -100.
        log_p = jnp.maximum(jnp.log(p), -100.0)
        log_1mp = jnp.maximum(jnp.log(1.0 - p), -100.0)

        # contrib = -(BCE * mask); the single negation happens in the wrapper.
        ym = y * m
        contrib = ym * log_p + (m - ym) * log_1mp

        # Fold the (tm, 128) tile into one vreg-shaped (8, 128) partial sum:
        # pure VPU adds, no per-step cross-lane reduce.
        loss_ref[...] += contrib.reshape(-1, SUBLANES, LANES).sum(axis=0)[None]
        msum_ref[...] += m.reshape(-1, SUBLANES, LANES).sum(axis=0)[None]

    return kernel


def loss_2body(pred_y, label_y, mask):
    """Masked BCE loss, identical semantics to the PyTorch `loss_2body` module.

    pred_y, label_y, mask: same arbitrary shape (e.g. NCHW). Returns a scalar f32.
    (If sum(mask) == 0 the result is NaN/inf, matching the PyTorch module.)
    """
    total = int(np.prod(pred_y.shape))

    align = max(_min_sublane_tile(pred_y.dtype),
                _min_sublane_tile(label_y.dtype),
                _min_sublane_tile(mask.dtype))

    padded_total = _round_up(max(total, 1), LANES)
    rows = padded_total // LANES
    if rows < align:                       # tiny inputs: keep one legal block
        rows = align
        padded_total = rows * LANES

    max_tm = _default_max_tm()
    tm = min(max_tm, _round_up(_cdiv(rows, NUM_SPLITS), align))
    nblocks = _cdiv(rows, tm)
    steps = _cdiv(nblocks, NUM_SPLITS)
    # In-kernel masking needed iff the last block is partial or some requested
    # block index falls past the end (clamped duplicate, zeroed by the mask).
    ragged = (rows % tm != 0) or (nblocks % NUM_SPLITS != 0)

    def prep(x):
        if padded_total == total:
            # Common path: free reshape, no extra HBM traffic.
            return x.reshape(rows, LANES)
        # TODO(synk): only hit when numel % 128 != 0 (or tiny inputs) — one
        # small pad copy; zero-padded elements contribute exactly 0.
        flat = jnp.pad(x.reshape(-1), (0, padded_total - total))
        return flat.reshape(rows, LANES)

    p2 = prep(pred_y)
    y2 = prep(label_y)
    m2 = prep(mask)

    in_spec = pl.BlockSpec(
        (tm, LANES),
        lambda c, i: (jnp.minimum(c * steps + i, nblocks - 1), 0))
    out_spec = pl.BlockSpec((1, SUBLANES, LANES), lambda c, i: (c, 0, 0))

    in_bytes = total * (jnp.dtype(pred_y.dtype).itemsize
                        + jnp.dtype(label_y.dtype).itemsize
                        + jnp.dtype(mask.dtype).itemsize)

    neg_loss_parts, mask_parts = pl.pallas_call(
        _make_kernel(tm, steps, rows, ragged),
        out_shape=(
            jax.ShapeDtypeStruct((NUM_SPLITS, SUBLANES, LANES), jnp.float32),
            jax.ShapeDtypeStruct((NUM_SPLITS, SUBLANES, LANES), jnp.float32),
        ),
        grid_spec=pltpu.PrefetchScalarGridSpec(
            num_scalar_prefetch=0,
            grid=(NUM_SPLITS, steps),
            in_specs=[in_spec, in_spec, in_spec],
            out_specs=[out_spec, out_spec],
        ),
        compiler_params=pltpu.CompilerParams(
            dimension_semantics=("parallel", "arbitrary"),
            vmem_limit_bytes=VMEM_LIMIT_BYTES,
        ),
        cost_estimate=pl.CostEstimate(
            flops=8 * total,
            transcendentals=2 * total,
            bytes_accessed=in_bytes,
        ),
    )(p2, y2, m2)

    # Tiny final cross-lane reduce + negate + divide in plain JAX.
    return -jnp.sum(neg_loss_parts) / jnp.sum(mask_parts)


def _reference(pred_y, label_y, mask):
    p = pred_y.astype(jnp.float32)
    y = label_y.astype(jnp.float32)
    m = mask.astype(jnp.float32)
    bce = -(y * jnp.maximum(jnp.log(p), -100.0)
            + (1.0 - y) * jnp.maximum(jnp.log(1.0 - p), -100.0))
    return jnp.sum(bce * m) / jnp.sum(m)


if __name__ == "__main__":
    key = jax.random.PRNGKey(0)

    # (2,4,16,16): clean path (no masking); (2,3,16,16): exercises the ragged
    # partial-block + clamped-block masking path.
    for shape in [(2, 4, 16, 16), (2, 3, 16, 16)]:
        k1, k2, k3, key = jax.random.split(key, 4)
        pred_y = jax.nn.sigmoid(jax.random.normal(k1, shape, dtype=jnp.float32))
        label_y = jax.random.bernoulli(k2, 0.5, shape).astype(jnp.float32)
        mask = jax.random.bernoulli(k3, 0.7, shape).astype(jnp.float32)

        loss = jax.block_until_ready(loss_2body(pred_y, label_y, mask))
        ref = jax.block_until_ready(_reference(pred_y, label_y, mask))
        if not np.allclose(np.asarray(loss), np.asarray(ref), rtol=1e-5, atol=1e-6):
            raise AssertionError(f"mismatch for {shape}: pallas={loss} ref={ref}")

    print("KERNEL_OK")
</pallas_src>

<mosaic_0001>
module attributes {stable_mosaic.version = 11 : i64} {
  func.func @kernel(%arg0: i32, %arg1: i32, %arg2: memref<8x128xf32, #tpu.memory_space<vmem>>, %arg3: memref<8x128xf32, #tpu.memory_space<vmem>>, %arg4: memref<8x128xf32, #tpu.memory_space<vmem>>, %arg5: memref<1x8x128xf32, #tpu.memory_space<vmem>>, %arg6: memref<1x8x128xf32, #tpu.memory_space<vmem>>) attributes {dimension_semantics = [#tpu.dimension_semantics<parallel>, #tpu.dimension_semantics<arbitrary>], iteration_bounds = array<i64: 2, 1>, scalar_prefetch = 0 : i64, scratch_operands = 0 : i64, tpu.core_type = #tpu.core_type<tc>, window_params = [{transform_indices = @transform_0, window_bounds = array<i64: 8, 128>}, {transform_indices = @transform_1, window_bounds = array<i64: 8, 128>}, {transform_indices = @transform_2, window_bounds = array<i64: 8, 128>}, {transform_indices = @transform_3, window_bounds = array<i64: 1, 8, 128>}, {transform_indices = @transform_4, window_bounds = array<i64: 1, 8, 128>}]} {
    %c0_i32 = arith.constant 0 : i32
    %0 = arith.cmpi eq, %arg1, %c0_i32 : i32
    %1 = arith.extui %0 : i1 to i32
    %c0_i32_0 = arith.constant 0 : i32
    %2 = arith.cmpi ne, %1, %c0_i32_0 : i32
    scf.if %2 {
      %cst_22 = arith.constant 0.000000e+00 : f32
      %31 = vector.broadcast %cst_22 : f32 to vector<1x8x128xf32>
      %c0_23 = arith.constant 0 : index
      %c0_24 = arith.constant 0 : index
      %c0_25 = arith.constant 0 : index
      %32 = vector.load %arg5[%c0_23, %c0_24, %c0_25] : memref<1x8x128xf32, #tpu.memory_space<vmem>>, vector<1x8x128xf32>
      tpu.vector_store %arg5[%c0_23, %c0_24, %c0_25], %31 {strides = array<i32>} : memref<1x8x128xf32, #tpu.memory_space<vmem>>, vector<1x8x128xf32>,
      %cst_26 = arith.constant 0.000000e+00 : f32
      %33 = vector.broadcast %cst_26 : f32 to vector<1x8x128xf32>
      %c0_27 = arith.constant 0 : index
      %c0_28 = arith.constant 0 : index
      %c0_29 = arith.constant 0 : index
      %34 = vector.load %arg6[%c0_27, %c0_28, %c0_29] : memref<1x8x128xf32, #tpu.memory_space<vmem>>, vector<1x8x128xf32>
      tpu.vector_store %arg6[%c0_27, %c0_28, %c0_29], %33 {strides = array<i32>} : memref<1x8x128xf32, #tpu.memory_space<vmem>>, vector<1x8x128xf32>,
    } else {
    }
    %c0 = arith.constant 0 : index
    %c0_1 = arith.constant 0 : index
    %3 = vector.load %arg2[%c0, %c0_1] : memref<8x128xf32, #tpu.memory_space<vmem>>, vector<8x128xf32>
    %c0_2 = arith.constant 0 : index
    %c0_3 = arith.constant 0 : index
    %4 = vector.load %arg3[%c0_2, %c0_3] : memref<8x128xf32, #tpu.memory_space<vmem>>, vector<8x128xf32>
    %c0_4 = arith.constant 0 : index
    %c0_5 = arith.constant 0 : index
    %5 = vector.load %arg4[%c0_4, %c0_5] : memref<8x128xf32, #tpu.memory_space<vmem>>, vector<8x128xf32>
    %6 = math.log %3 : vector<8x128xf32>
    %cst = arith.constant -1.000000e+02 : f32
    %7 = vector.broadcast %cst : f32 to vector<8x128xf32>
    %8 = arith.maximumf %6, %7 : vector<8x128xf32>
    %cst_6 = arith.constant 1.000000e+00 : f32
    %9 = vector.broadcast %cst_6 : f32 to vector<8x128xf32>
    %10 = arith.subf %9, %3 : vector<8x128xf32>
    %11 = math.log %10 : vector<8x128xf32>
    %cst_7 = arith.constant -1.000000e+02 : f32
    %12 = vector.broadcast %cst_7 : f32 to vector<8x128xf32>
    %13 = arith.maximumf %11, %12 : vector<8x128xf32>
    %14 = arith.mulf %4, %5 : vector<8x128xf32>
    %15 = arith.mulf %14, %8 : vector<8x128xf32>
    %16 = arith.subf %5, %14 : vector<8x128xf32>
    %17 = arith.mulf %16, %13 : vector<8x128xf32>
    %18 = arith.addf %15, %17 : vector<8x128xf32>
    %c0_8 = arith.constant 0 : index
    %c0_9 = arith.constant 0 : index
    %c0_10 = arith.constant 0 : index
    %19 = vector.load %arg5[%c0_8, %c0_9, %c0_10] : memref<1x8x128xf32, #tpu.memory_space<vmem>>, vector<1x8x128xf32>
    %20 = vector.shape_cast %18 : vector<8x128xf32> to vector<1x8x128xf32>
    %cst_11 = arith.constant dense<0.000000e+00> : vector<8x128xf32>
    %21 = vector.multi_reduction <add>, %20, %cst_11 [0] : vector<1x8x128xf32> to vector<8x128xf32>
    %22 = vector.shape_cast %21 : vector<8x128xf32> to vector<1x8x128xf32>
    %23 = arith.addf %19, %22 : vector<1x8x128xf32>
    %c0_12 = arith.constant 0 : index
    %c0_13 = arith.constant 0 : index
    %c0_14 = arith.constant 0 : index
    %24 = vector.load %arg5[%c0_12, %c0_13, %c0_14] : memref<1x8x128xf32, #tpu.memory_space<vmem>>, vector<1x8x128xf32>
    tpu.vector_store %arg5[%c0_12, %c0_13, %c0_14], %23 {strides = array<i32>} : memref<1x8x128xf32, #tpu.memory_space<vmem>>, vector<1x8x128xf32>,
    %c0_15 = arith.constant 0 : index
    %c0_16 = arith.constant 0 : index
    %c0_17 = arith.constant 0 : index
    %25 = vector.load %arg6[%c0_15, %c0_16, %c0_17] : memref<1x8x128xf32, #tpu.memory_space<vmem>>, vector<1x8x128xf32>
    %26 = vector.shape_cast %5 : vector<8x128xf32> to vector<1x8x128xf32>
    %cst_18 = arith.constant dense<0.000000e+00> : vector<8x128xf32>
    %27 = vector.multi_reduction <add>, %26, %cst_18 [0] : vector<1x8x128xf32> to vector<8x128xf32>
    %28 = vector.shape_cast %27 : vector<8x128xf32> to vector<1x8x128xf32>
    %29 = arith.addf %25, %28 : vector<1x8x128xf32>
    %c0_19 = arith.constant 0 : index
    %c0_20 = arith.constant 0 : index
    %c0_21 = arith.constant 0 : index
    %30 = vector.load %arg6[%c0_19, %c0_20, %c0_21] : memref<1x8x128xf32, #tpu.memory_space<vmem>>, vector<1x8x128xf32>
    tpu.vector_store %arg6[%c0_19, %c0_20, %c0_21], %29 {strides = array<i32>} : memref<1x8x128xf32, #tpu.memory_space<vmem>>, vector<1x8x128xf32>,
    return
  }
  func.func @transform_0(%arg0: i32, %arg1: i32) -> (i32, i32) {
    %c1_i32 = arith.constant 1 : i32
    %0 = arith.muli %arg0, %c1_i32 : i32
    %1 = arith.addi %0, %arg1 : i32
    %c1_i32_0 = arith.constant 1 : i32
    %2 = arith.minsi %1, %c1_i32_0 : i32
    %c0_i32 = arith.constant 0 : i32
    %c0_i32_1 = arith.constant 0 : i32
    return %2, %c0_i32 : i32, i32
  }
  func.func @transform_1(%arg0: i32, %arg1: i32) -> (i32, i32) {
    %c1_i32 = arith.constant 1 : i32
    %0 = arith.muli %arg0, %c1_i32 : i32
    %1 = arith.addi %0, %arg1 : i32
    %c1_i32_0 = arith.constant 1 : i32
    %2 = arith.minsi %1, %c1_i32_0 : i32
    %c0_i32 = arith.constant 0 : i32
    %c0_i32_1 = arith.constant 0 : i32
    return %2, %c0_i32 : i32, i32
  }
  func.func @transform_2(%arg0: i32, %arg1: i32) -> (i32, i32) {
    %c1_i32 = arith.constant 1 : i32
    %0 = arith.muli %arg0, %c1_i32 : i32
    %1 = arith.addi %0, %arg1 : i32
    %c1_i32_0 = arith.constant 1 : i32
    %2 = arith.minsi %1, %c1_i32_0 : i32
    %c0_i32 = arith.constant 0 : i32
    %c0_i32_1 = arith.constant 0 : i32
    return %2, %c0_i32 : i32, i32
  }
  func.func @transform_3(%arg0: i32, %arg1: i32) -> (i32, i32, i32) {
    %c0_i32 = arith.constant 0 : i32
    %c0_i32_0 = arith.constant 0 : i32
    %c0_i32_1 = arith.constant 0 : i32
    return %arg0, %c0_i32, %c0_i32_0 : i32, i32, i32
  }
  func.func @transform_4(%arg0: i32, %arg1: i32) -> (i32, i32, i32) {
    %c0_i32 = arith.constant 0 : i32
    %c0_i32_0 = arith.constant 0 : i32
    %c0_i32_1 = arith.constant 0 : i32
    return %arg0, %c0_i32, %c0_i32_0 : i32, i32, i32
  }
}

</mosaic_0001>

<llo_original>
// kernel: tpu_custom_call.1
$region0: #{tpu_custom_call.1}
  #allocation0 [shape = 'u32[]', space=smem, size = 0x4, offset = 0x4, fixed_abs, tag = 'smem constant byte address 0x4 - core index']
  #allocation1 [shape = 'u32[72,128]{1,0:T(1,128)}', space=vmem, size = 0x9000, scoped, tag = 'internal scratch']
  %s0 = inlined_call_operand.hbm [shape: f32[16,128], index: 0, kind: input, shape index: {}]
  %s1 = inlined_call_operand.hbm [shape: f32[16,128], index: 1, kind: input, shape index: {}]
  %s2 = inlined_call_operand.hbm [shape: f32[16,128], index: 2, kind: input, shape index: {}]
  %s3 = inlined_call_operand.hbm [shape: f32[2,8,128], index: 3, kind: output, shape index: {0}]
  %s4 = inlined_call_operand.hbm [shape: f32[2,8,128], index: 4, kind: output, shape index: {1}]
  %5 = xla_tuple %s3, %s4
  %s6 = sld [smem:[#allocation0]]
  $region69: #{tpu_custom_call.1} parent=0
    _
  %s8 = ssub.s32 1, %s6
  %s9 = scalar_select 0, %s8, %s6
  $region1: #{tpu_custom_call.1} parent=0
    #allocation2 [shape = 'u8[8192]{0}', space=vmem, size = 0x2000, scoped, tag = 'input window, operand 0']
    #allocation3 [shape = 's32[2]{0}', space=sflag, size = 0x8, scoped, tag = 'scoped memory for tpu_custom_call.1']
    #allocation4 [shape = 's32[2]{0}', space=sflag, size = 0x8, scoped, tag = 'scoped memory for tpu_custom_call.1']
    #allocation5 [shape = 'u8[8192]{0}', space=vmem, size = 0x2000, scoped, tag = 'input window, operand 1']
    #allocation6 [shape = 's32[2]{0}', space=sflag, size = 0x8, scoped, tag = 'scoped memory for tpu_custom_call.1']
    #allocation7 [shape = 'u8[8192]{0}', space=vmem, size = 0x2000, scoped, tag = 'input window, operand 2']
    #allocation8 [shape = 'u8[8192]{0}', space=vmem, size = 0x2000, scoped, tag = 'output window, operand 0']
    #allocation9 [shape = 'u8[8192]{0}', space=vmem, size = 0x2000, scoped, tag = 'output window, operand 1']
    #allocation10 [shape = 's32[2]{0}', space=sflag, size = 0x8, scoped, tag = 'scoped memory for tpu_custom_call.1']
    %10 = vsyncpa [#allocation3], 0
    %s11 = scalar_lea.sflag [#allocation3], 1
    %12 = vsyncpa %s11, 0
    %13 = vsyncpa [#allocation6], 0
    %s14 = scalar_lea.sflag [#allocation6], 1
    %15 = vsyncpa %s14, 0
    %16 = vsyncpa [#allocation4], 0
    %s17 = scalar_lea.sflag [#allocation4], 1
    %18 = vsyncpa %s17, 0
    %19 = vsyncpa [#allocation10], 0
    %s20 = scalar_lea.sflag [#allocation10], 1
    %21 = vsyncpa %s20, 0
    loop: start=0, step=1, limit=4
    $region2: #{tpu_custom_call.1} parent=1 // loop_pre_header
      _
    $region3: #{tpu_custom_call.1} parent=1 // loop_header
      %s23 = sphi 0, %s27
      %p24 = scmp.ge.s32.totalorder %s23, 4
      %s30 = sphi 0, %s42
      %s31 = sphi 0, %s38
      %s32 = sphi 0, %s30
      %s33 = sphi 0, %s31
      %s34 = sphi 0, %s32
      %s35 = sphi 0, %s33
      %s51 = sphi 0, %s53
      %s54 = sphi 0, %s51
      %s55 = sphi 0, %s54
      %s71 = sphi 0, %s55
      %s83 = sphi 0, %s85
      %s86 = sphi 0, %s83
      %s87 = sphi 0, %s86
      %s103 = sphi 0, %s87
      %s115 = sphi 0, %s117
      %s118 = sphi 0, %s115
      %s119 = sphi 0, %s118
      %s135 = sphi 0, %s119
      %s141 = sphi 0, %s143
      %s144 = sphi 0, %s141
      %s145 = sphi 0, %s144
      %s161 = sphi 0, %s145
      %s167 = sphi 0, %s169
      %s170 = sphi 0, %s167
      %s171 = sphi 0, %s170
      %s187 = sphi 0, %s171
    $region4: #{tpu_custom_call.1} parent=1 // loop_header_branch
      %26 = sbr.rel (%p24) target = $region8
    $region5: #{tpu_custom_call.1} parent=1 // loop_body
      %s28 = ssub.s32 %s23, 1
      %s29 = ssub.s32 %s23, 2
      %s36 = sadd.s32 1, %s31
      %p37 = scmp.ge.s32.totalorder %s36, 1
      %s38 = scalar_select %p37, 0, %s36
      %s39 = sadd.s32 1, %s30
      %s40 = scalar_select %p37, %s39, %s30
      %p41 = scmp.ge.s32.totalorder %s40, 2
      %s42 = scalar_select %p41, 0, %s40
      %s43 = sadd.s32 %s30, %s31
      %p44 = scmp.lt.s32.totalorder %s43, 1
      %s45 = scalar_select %p44, %s43, 1
      %s46 = sadd.s32 %s42, %s38
      %p47 = scmp.lt.s32.totalorder %s46, 1
      %s48 = scalar_select %p47, %s46, 1
      %s49 = ssub.s32 %s45, %s48
      %p50 = scmp.eq.s32.totalorder %s49, 0
      %s52 = sadd.s32 %s51, 1
      %s53 = scalar_select %p50, %s51, %s52
      %p56 = pneg %p50
      %p57 = scmp.eq.s32.totalorder %s23, 1
      %p58 = por %p56, %p57
      %p59 = scmp.ne.s32.totalorder %s51, %s54
      %p60 = scmp.eq.s32.totalorder %s23, 0
      %p61 = por %p59, %p60
      %p62 = scmp.ne.s32.totalorder %s51, %s54
      %p63 = scmp.eq.s32.totalorder %s28, 1
      %p64 = por %p62, %p63
      %p65 = scmp.ne.s32.totalorder %s54, %s55
      %p66 = scmp.eq.s32.totalorder %s28, 0
      %p67 = por %p65, %p66
      %p68 = scmp.ne.s32.totalorder %s54, %s55
      %p69 = scmp.eq.s32.totalorder %s29, 1
      %p70 = por %p68, %p69
      %p72 = scmp.ne.s32.totalorder %s55, %s71
      %p73 = scmp.eq.s32.totalorder %s29, 0
      %p74 = por %p72, %p73
      %s75 = sadd.s32 %s30, %s31
      %p76 = scmp.lt.s32.totalorder %s75, 1
      %s77 = scalar_select %p76, %s75, 1
      %s78 = sadd.s32 %s42, %s38
      %p79 = scmp.lt.s32.totalorder %s78, 1
      %s80 = scalar_select %p79, %s78, 1
      %s81 = ssub.s32 %s77, %s80
      %p82 = scmp.eq.s32.totalorder %s81, 0
      %s84 = sadd.s32 %s83, 1
      %s85 = scalar_select %p82, %s83, %s84
      %p88 = pneg %p82
      %p89 = scmp.eq.s32.totalorder %s23, 1
      %p90 = por %p88, %p89
      %p91 = scmp.ne.s32.totalorder %s83, %s86
      %p92 = scmp.eq.s32.totalorder %s23, 0
      %p93 = por %p91, %p92
      %p94 = scmp.ne.s32.totalorder %s83, %s86
      %p95 = scmp.eq.s32.totalorder %s28, 1
      %p96 = por %p94, %p95
      %p97 = scmp.ne.s32.totalorder %s86, %s87
      %p98 = scmp.eq.s32.totalorder %s28, 0
      %p99 = por %p97, %p98
      %p100 = scmp.ne.s32.totalorder %s86, %s87
      %p101 = scmp.eq.s32.totalorder %s29, 1
      %p102 = por %p100, %p101
      %p104 = scmp.ne.s32.totalorder %s87, %s103
      %p105 = scmp.eq.s32.totalorder %s29, 0
      %p106 = por %p104, %p105
      %s107 = sadd.s32 %s30, %s31
      %p108 = scmp.lt.s32.totalorder %s107, 1
      %s109 = scalar_select %p108, %s107, 1
      %s110 = sadd.s32 %s42, %s38
      %p111 = scmp.lt.s32.totalorder %s110, 1
      %s112 = scalar_select %p111, %s110, 1
      %s113 = ssub.s32 %s109, %s112
      %p114 = scmp.eq.s32.totalorder %s113, 0
      %s116 = sadd.s32 %s115, 1
      %s117 = scalar_select %p114, %s115, %s116
      %p120 = pneg %p114
      %p121 = scmp.eq.s32.totalorder %s23, 1
      %p122 = por %p120, %p121
      %p123 = scmp.ne.s32.totalorder %s115, %s118
      %p124 = scmp.eq.s32.totalorder %s23, 0
      %p125 = por %p123, %p124
      %p126 = scmp.ne.s32.totalorder %s115, %s118
      %p127 = scmp.eq.s32.totalorder %s28, 1
      %p128 = por %p126, %p127
      %p129 = scmp.ne.s32.totalorder %s118, %s119
      %p130 = scmp.eq.s32.totalorder %s28, 0
      %p131 = por %p129, %p130
      %p132 = scmp.ne.s32.totalorder %s118, %s119
      %p133 = scmp.eq.s32.totalorder %s29, 1
      %p134 = por %p132, %p133
      %p136 = scmp.ne.s32.totalorder %s119, %s135
      %p137 = scmp.eq.s32.totalorder %s29, 0
      %p138 = por %p136, %p137
      %s139 = ssub.s32 %s30, %s42
      %p140 = scmp.eq.s32.totalorder %s139, 0
      %s142 = sadd.s32 %s141, 1
      %s143 = scalar_select %p140, %s141, %s142
      %p146 = pneg %p140
      %p147 = scmp.eq.s32.totalorder %s23, 1
      %p148 = por %p146, %p147
      %p149 = scmp.ne.s32.totalorder %s141, %s144
      %p150 = scmp.eq.s32.totalorder %s23, 0
      %p151 = por %p149, %p150
      %p152 = scmp.ne.s32.totalorder %s141, %s144
      %p153 = scmp.eq.s32.totalorder %s28, 1
      %p154 = por %p152, %p153
      %p155 = scmp.ne.s32.totalorder %s144, %s145
      %p156 = scmp.eq.s32.totalorder %s28, 0
      %p157 = por %p155, %p156
      %p158 = scmp.ne.s32.totalorder %s144, %s145
      %p159 = scmp.eq.s32.totalorder %s29, 1
      %p160 = por %p158, %p159
      %p162 = scmp.ne.s32.totalorder %s145, %s161
      %p163 = scmp.eq.s32.totalorder %s29, 0
      %p164 = por %p162, %p163
      %s165 = ssub.s32 %s30, %s42
      %p166 = scmp.eq.s32.totalorder %s165, 0
      %s168 = sadd.s32 %s167, 1
      %s169 = scalar_select %p166, %s167, %s168
      %p172 = pneg %p166
      %p173 = scmp.eq.s32.totalorder %s23, 1
      %p174 = por %p172, %p173
      %p175 = scmp.ne.s32.totalorder %s167, %s170
      %p176 = scmp.eq.s32.totalorder %s23, 0
      %p177 = por %p175, %p176
      %p178 = scmp.ne.s32.totalorder %s167, %s170
      %p179 = scmp.eq.s32.totalorder %s28, 1
      %p180 = por %p178, %p179
      %p181 = scmp.ne.s32.totalorder %s170, %s171
      %p182 = scmp.eq.s32.totalorder %s28, 0
      %p183 = por %p181, %p182
      %p184 = scmp.ne.s32.totalorder %s170, %s171
      %p185 = scmp.eq.s32.totalorder %s29, 1
      %p186 = por %p184, %p185
      %p188 = scmp.ne.s32.totalorder %s171, %s187
      %p189 = scmp.eq.s32.totalorder %s29, 0
      %p190 = por %p188, %p189
      %p191 = scmp.le.s32.totalorder 1, %s23
      %p192 = scmp.lt.s32.totalorder %s23, 3
      %p193 = pnand %p191, %p192
      %p194 = pneg %p193
      // Predicated region
      $region9: #{tpu_custom_call.1} parent=5 // pred_check
        _
      $region10: #{tpu_custom_call.1} parent=5 // pred_check_branch
        %196 = sbr.rel (%p193) target = $region12
      $region11: #{tpu_custom_call.1} parent=5 // pred_region
        %s197 = ssub.s32 %s23, 1
      $region12: #{tpu_custom_call.1} parent=5 // pred_fallthru
        _
      %p198 = scmp.lt.s32.totalorder %s23, 2
      // Predicated region
      $region13: #{tpu_custom_call.1} parent=5 // pred_check
        %p199 = pneg %p198
      $region14: #{tpu_custom_call.1} parent=5 // pred_check_branch
        %201 = sbr.rel (%p199) target = $region16
      $region15: #{tpu_custom_call.1} parent=5 // pred_region
        // Predicated region
        $region17: #{tpu_custom_call.1} parent=15 // pred_check
          %p202 = pneg %p61
        $region18: #{tpu_custom_call.1} parent=15 // pred_check_branch
          %204 = sbr.rel (%p202) target = $region20
        $region19: #{tpu_custom_call.1} parent=15 // pred_region
          %s205 = sand.u32 %s51, 1
          %s206 = scalar_lea.sflag [#allocation3], %s205
          %s207 = sand.u32 %s51, 1
          %s208 = smul.addr %s207, 8
          %s209 = scalar_lea.vmem [#allocation2], %s208
          %s210 = sadd.s32 %s30, %s31
          %p211 = scmp.lt.s32.totalorder %s210, 1
          %s212 = scalar_select %p211, %s210, 1
          %214 = vsyncadd %s206, 0
          %s215 = smul.addr %s212, 8
          %s216 = scalar_lea.hbm %s0, %s215
          %s218 = sshll.u32 %s216, 4
          %s219 = int_to_ptr.hbm [resolvable:$true] %s218
          %s220 = sshll.u32 %s209, 4
          %s221 = int_to_ptr.vmem [resolvable:$true] %s220
          %223 = dma.hbm_to_vmem [thread:$0]  %s219, 128, %s221, %s206
        $region20: #{tpu_custom_call.1} parent=15 // pred_fallthru
          _
        // Predicated region
        $region21: #{tpu_custom_call.1} parent=15 // pred_check
          %p224 = pneg %p93
        $region22: #{tpu_custom_call.1} parent=15 // pred_check_branch
          %226 = sbr.rel (%p224) target = $region24
        $region23: #{tpu_custom_call.1} parent=15 // pred_region
          %s227 = sand.u32 %s23, 1
          %s228 = scalar_lea.sflag [#allocation6], %s227
          %s229 = sand.u32 %s83, 1
          %s230 = smul.addr %s229, 8
          %s231 = scalar_lea.vmem [#allocation5], %s230
          %s232 = sadd.s32 %s30, %s31
          %p233 = scmp.lt.s32.totalorder %s232, 1
          %s234 = scalar_select %p233, %s232, 1
          %236 = vsyncadd %s228, 0
          %s237 = smul.addr %s234, 8
          %s238 = scalar_lea.hbm %s1, %s237
          %s240 = sshll.u32 %s238, 4
          %s241 = int_to_ptr.hbm [resolvable:$true] %s240
          %s242 = sshll.u32 %s231, 4
          %s243 = int_to_ptr.vmem [resolvable:$true] %s242
          %245 = dma.hbm_to_vmem [thread:$0]  %s241, 128, %s243, %s228
        $region24: #{tpu_custom_call.1} parent=15 // pred_fallthru
          _
        // Predicated region
        $region25: #{tpu_custom_call.1} parent=15 // pred_check
          %p246 = pneg %p125
        $region26: #{tpu_custom_call.1} parent=15 // pred_check_branch
          %248 = sbr.rel (%p246) target = $region28
        $region27: #{tpu_custom_call.1} parent=15 // pred_region
          %s249 = sand.u32 %s23, 1
          %s250 = scalar_lea.sflag [#allocation6], %s249
          %s251 = sand.u32 %s115, 1
          %s252 = smul.addr %s251, 8
          %s253 = scalar_lea.vmem [#allocation7], %s252
          %s254 = sadd.s32 %s30, %s31
          %p255 = scmp.lt.s32.totalorder %s254, 1
          %s256 = scalar_select %p255, %s254, 1
          %258 = vsyncadd %s250, 0
          %s259 = smul.addr %s256, 8
          %s260 = scalar_lea.hbm %s2, %s259
          %s262 = sshll.u32 %s260, 4
          %s263 = int_to_ptr.hbm [resolvable:$true] %s262
          %s264 = sshll.u32 %s253, 4
          %s265 = int_to_ptr.vmem [resolvable:$true] %s264
          %267 = dma.hbm_to_vmem [thread:$0]  %s263, 128, %s265, %s250
        $region28: #{tpu_custom_call.1} parent=15 // pred_fallthru
          _
      $region16: #{tpu_custom_call.1} parent=5 // pred_fallthru
        _
      %p268 = scmp.le.s32.totalorder 1, %s23
      %p269 = scmp.lt.s32.totalorder %s23, 3
      %p270 = pnand %p268, %p269
      %p271 = pneg %p270
      // Predicated region
      $region29: #{tpu_custom_call.1} parent=5 // pred_check
        _
      $region30: #{tpu_custom_call.1} parent=5 // pred_check_branch
        %273 = sbr.rel (%p270) target = $region32
      $region31: #{tpu_custom_call.1} parent=5 // pred_region
        %s274 = ssub.s32 %s23, 1
        %s275 = sand.u32 %s54, 1
        %s276 = scalar_lea.sflag [#allocation3], %s275
        %s277 = sand.u32 %s54, 1
        %s278 = smul.addr %s277, 8
        %s279 = scalar_lea.vmem [#allocation2], %s278
        // Predicated region
        $region33: #{tpu_custom_call.1} parent=31 // pred_check
          %p280 = pneg %p67
        $region34: #{tpu_custom_call.1} parent=31 // pred_check_branch
          %282 = sbr.rel (%p280) target = $region36
        $region35: #{tpu_custom_call.1} parent=31 // pred_region
          %284 = dma.done %s276, 128
        $region36: #{tpu_custom_call.1} parent=31 // pred_fallthru
          _
        %s285 = sand.u32 %s28, 1
        %s286 = scalar_lea.sflag [#allocation6], %s285
        %s287 = sand.u32 %s86, 1
        %s288 = smul.addr %s287, 8
        %s289 = scalar_lea.vmem [#allocation5], %s288
        // Predicated region
        $region37: #{tpu_custom_call.1} parent=31 // pred_check
          %p290 = pneg %p99
        $region38: #{tpu_custom_call.1} parent=31 // pred_check_branch
          %292 = sbr.rel (%p290) target = $region40
        $region39: #{tpu_custom_call.1} parent=31 // pred_region
          %294 = dma.done %s286, 128
        $region40: #{tpu_custom_call.1} parent=31 // pred_fallthru
          _
        %s295 = sand.u32 %s28, 1
        %s296 = scalar_lea.sflag [#allocation6], %s295
        %s297 = sand.u32 %s118, 1
        %s298 = smul.addr %s297, 8
        %s299 = scalar_lea.vmem [#allocation7], %s298
        // Predicated region
        $region41: #{tpu_custom_call.1} parent=31 // pred_check
          %p300 = pneg %p131
        $region42: #{tpu_custom_call.1} parent=31 // pred_check_branch
          %302 = sbr.rel (%p300) target = $region44
        $region43: #{tpu_custom_call.1} parent=31 // pred_region
          %304 = dma.done %s296, 128
        $region44: #{tpu_custom_call.1} parent=31 // pred_fallthru
          _
        %s305 = sand.u32 %s54, 1
        %s306 = scalar_lea.sflag [#allocation3], %s305
        %s307 = sand.u32 %s54, 1
        %s308 = smul.addr %s307, 8
        %s309 = scalar_lea.vmem [#allocation2], %s308
        %p310 = pneg %p67
        %p311 = pneg %p64
        %s312 = sand.u32 %s28, 1
        %s313 = scalar_lea.sflag [#allocation6], %s312
        %s314 = sand.u32 %s86, 1
        %s315 = smul.addr %s314, 8
        %s316 = scalar_lea.vmem [#allocation5], %s315
        %p317 = pneg %p99
        %p318 = pneg %p96
        %s319 = sand.u32 %s28, 1
        %s320 = scalar_lea.sflag [#allocation6], %s319
        %s321 = sand.u32 %s118, 1
        %s322 = smul.addr %s321, 8
        %s323 = scalar_lea.vmem [#allocation7], %s322
        %p324 = pneg %p131
        %p325 = pneg %p128
        %p326 = pneg %p157
        %p327 = pneg %p154
        %s328 = sand.u32 %s144, 1
        %s329 = scalar_lea.sflag [#allocation4], %s328
        %s330 = sand.u32 %s144, 1
        %s331 = smul.addr %s330, 8
        %s332 = scalar_lea.vmem [#allocation8], %s331
        %p333 = pneg %p183
        %p334 = pneg %p180
        %s335 = sand.u32 %s170, 1
        %s336 = scalar_lea.sflag [#allocation10], %s335
        %s337 = sand.u32 %s170, 1
        %s338 = smul.addr %s337, 8
        %s339 = scalar_lea.vmem [#allocation9], %s338
        %s340 = sadd.s32 %s32, %s33
        %p341 = scmp.lt.s32.totalorder %s340, 1
        %s342 = scalar_select %p341, %s340, 1
        %s343 = sadd.s32 %s32, %s33
        %p344 = scmp.lt.s32.totalorder %s343, 1
        %s345 = scalar_select %p344, %s343, 1
        %s346 = sadd.s32 %s32, %s33
        %p347 = scmp.lt.s32.totalorder %s346, 1
        %s348 = scalar_select %p347, %s346, 1
        %p349 = scmp.eq.s32.totalorder %s33, 0
        // Predicated region
        $region45: #{tpu_custom_call.1} parent=31 // pred_check
          %p350 = pneg %p349
        $region46: #{tpu_custom_call.1} parent=31 // pred_check_branch
          %352 = sbr.rel (%p350) target = $region48
        $region47: #{tpu_custom_call.1} parent=31 // pred_region
          %353 = vst [vmem:[%s332] sm:$0xff] 0.0
          %354 = vst [vmem:[%s339] sm:$0xff] 0.0
        $region48: #{tpu_custom_call.1} parent=31 // pred_fallthru
          _
        %v355 = vld [vmem:[%s279] sm:$0xff]
        %v356 = vld [vmem:[%s289] sm:$0xff]
        %v357 = vld [vmem:[%s299] sm:$0xff]
        %v358 = vlog2.pop %v355
        %v359 = vmul.f32 %v358, 0.6931472
        %v360 = vmax.f32 %v359, -100.0
        %v361 = vsub.f32 1.0, %v355
        %v362 = vlog2.pop %v361
        %v363 = vmul.f32 %v362, 0.6931472
        %v364 = vmax.f32 %v363, -100.0
        %v365 = vmul.f32 %v356, %v357
        %v366 = vmul.f32 %v365, %v360
        %v367 = vsub.f32 %v357, %v365
        %v368 = vmul.f32 %v367, %v364
        %v369 = vadd.f32 %v366, %v368
        %v370 = vld [vmem:[%s332] sm:$0xff]
        %v371 = vadd.f32 %v369, 0.0
        %v372 = vadd.f32 %v370, %v371
        %373 = vst [vmem:[%s332] sm:$0xff] %v372
        %v374 = vld [vmem:[%s339] sm:$0xff]
        %v375 = vadd.f32 %v357, 0.0
        %v376 = vadd.f32 %v374, %v375
        %377 = vst [vmem:[%s339] sm:$0xff] %v376
        %s378 = sand.u32 %s144, 1
        %s379 = scalar_lea.sflag [#allocation4], %s378
        %s380 = sand.u32 %s144, 1
        %s381 = smul.addr %s380, 8
        %s382 = scalar_lea.vmem [#allocation8], %s381
        %s383 = sand.u32 %s170, 1
        %s384 = scalar_lea.sflag [#allocation10], %s383
        %s385 = sand.u32 %s170, 1
        %s386 = smul.addr %s385, 8
        %s387 = scalar_lea.vmem [#allocation9], %s386
        // Predicated region
        $region49: #{tpu_custom_call.1} parent=31 // pred_check
          %p388 = pneg %p154
        $region50: #{tpu_custom_call.1} parent=31 // pred_check_branch
          %390 = sbr.rel (%p388) target = $region52
        $region51: #{tpu_custom_call.1} parent=31 // pred_region
          %392 = vsyncadd %s379, 0
          %s393 = smul.addr %s32, 8
          %s394 = scalar_lea.hbm %s3, %s393
          %s396 = sshll.u32 %s382, 4
          %s397 = int_to_ptr.vmem [resolvable:$true] %s396
          %s398 = sshll.u32 %s394, 4
          %s399 = int_to_ptr.hbm [resolvable:$true] %s398
          %401 = dma.vmem_to_hbm [thread:$0]  %s397, 128, %s399, %s379
        $region52: #{tpu_custom_call.1} parent=31 // pred_fallthru
          _
        // Predicated region
        $region53: #{tpu_custom_call.1} parent=31 // pred_check
          %p402 = pneg %p180
        $region54: #{tpu_custom_call.1} parent=31 // pred_check_branch
          %404 = sbr.rel (%p402) target = $region56
        $region55: #{tpu_custom_call.1} parent=31 // pred_region
          %406 = vsyncadd %s384, 0
          %s407 = smul.addr %s32, 8
          %s408 = scalar_lea.hbm %s4, %s407
          %s410 = sshll.u32 %s387, 4
          %s411 = int_to_ptr.vmem [resolvable:$true] %s410
          %s412 = sshll.u32 %s408, 4
          %s413 = int_to_ptr.hbm [resolvable:$true] %s412
          %415 = dma.vmem_to_hbm [thread:$0]  %s411, 128, %s413, %s384
        $region56: #{tpu_custom_call.1} parent=31 // pred_fallthru
          _
      $region32: #{tpu_custom_call.1} parent=5 // pred_fallthru
        _
      %p416 = scmp.le.s32.totalorder 2, %s23
      // Predicated region
      $region57: #{tpu_custom_call.1} parent=5 // pred_check
        %p417 = pneg %p416
      $region58: #{tpu_custom_call.1} parent=5 // pred_check_branch
        %419 = sbr.rel (%p417) target = $region60
      $region59: #{tpu_custom_call.1} parent=5 // pred_region
        %s420 = ssub.s32 %s23, 2
        // Predicated region
        $region61: #{tpu_custom_call.1} parent=59 // pred_check
          %p421 = pneg %p160
        $region62: #{tpu_custom_call.1} parent=59 // pred_check_branch
          %423 = sbr.rel (%p421) target = $region64
        $region63: #{tpu_custom_call.1} parent=59 // pred_region
          %s424 = sand.u32 %s145, 1
          %s425 = scalar_lea.sflag [#allocation4], %s424
          %s426 = sand.u32 %s145, 1
          %s427 = smul.addr %s426, 8
          %s428 = scalar_lea.vmem [#allocation8], %s427
          %430 = dma.done %s425, 128
        $region64: #{tpu_custom_call.1} parent=59 // pred_fallthru
          _
        // Predicated region
        $region65: #{tpu_custom_call.1} parent=59 // pred_check
          %p431 = pneg %p186
        $region66: #{tpu_custom_call.1} parent=59 // pred_check_branch
          %433 = sbr.rel (%p431) target = $region68
        $region67: #{tpu_custom_call.1} parent=59 // pred_region
          %s434 = sand.u32 %s171, 1
          %s435 = scalar_lea.sflag [#allocation10], %s434
          %s436 = sand.u32 %s171, 1
          %s437 = smul.addr %s436, 8
          %s438 = scalar_lea.vmem [#allocation9], %s437
          %440 = dma.done %s435, 128
        $region68: #{tpu_custom_call.1} parent=59 // pred_fallthru
          _
      $region60: #{tpu_custom_call.1} parent=5 // pred_fallthru
        _
    $region6: #{tpu_custom_call.1} parent=1 // loop_footer
      %s27 = sadd.s32 1, %s23
    $region7: #{tpu_custom_call.1} parent=1 // loop_footer_branch
      %22 = sbr.rel target = $region3
    $region8: #{tpu_custom_call.1} parent=1 // loop_exit
      _
    %441 = vsyncpa [#allocation3], 1
    %s442 = scalar_lea.sflag [#allocation3], 1
    %443 = vsyncpa %s442, 1
    %444 = vsyncpa [#allocation6], 1
    %s445 = scalar_lea.sflag [#allocation6], 1
    %446 = vsyncpa %s445, 1
    %447 = vsyncpa [#allocation4], 1
    %s448 = scalar_lea.sflag [#allocation4], 1
    %449 = vsyncpa %s448, 1
    %450 = vsyncpa [#allocation10], 1
    %s451 = scalar_lea.sflag [#allocation10], 1
    %452 = vsyncpa %s451, 1

</llo_original>
